<compile_context>
chip_gen: v7x
topology: tpu7x:2x2x1
jax: 0.10.0
libtpu: 0.0.40
codegen_flags: <defaults>
</compile_context>

<pallas_src>
import jax
import jax.numpy as jnp
from jax.experimental import pallas as pl
from jax.experimental.pallas import tpu as pltpu


def _copy_kernel(x_ref, o_ref):
    # identity copy of one lane-dense tile (pure DMA/VPU pass-through)
    o_ref[...] = x_ref[...]


def _resolve_shape(total, shape):
    """Resolve a torch-style view shape (supports a single -1, zero dims)."""
    shape = tuple(int(s) for s in shape)
    if -1 in shape:
        neg = shape.index(-1)
        known = 1
        for i, s in enumerate(shape):
            if i != neg:
                known *= s
        if known == 0:
            assert total == 0, "cannot infer -1 with zero-sized dims"
            inferred = 0
        else:
            assert total % known == 0, "invalid view shape"
            inferred = total // known
        shape = shape[:neg] + (inferred,) + shape[neg + 1:]
    prod = 1
    for s in shape:
        prod *= s
    assert prod == total, "view shape must preserve number of elements"
    return shape


def _round_up(x, m):
    return ((x + m - 1) // m) * m


def _sublane_multiple(dtype):
    # f32 -> 8, bf16/f16 -> 16, int8/fp8 -> 32 (packed dtypes tile sublanes
    # in pairs/quads; keep blocks full vregs, no padded partial stores).
    itemsize = jnp.dtype(dtype).itemsize
    return max(8, 32 // itemsize)


# Candidate lane widths, widest first (lane-dense output is the biggest lever).
_COL_CANDIDATES = (4096, 2048, 1024, 512, 256, 128)
# Keep at least this many grid steps on large tensors so neighbouring steps'
# input/output DMAs overlap.
_MIN_PIPELINE_STEPS = 4


def _vmem_budget_bytes():
    """Generation-aware scoped-VMEM budget for this kernel."""
    try:
        phys = int(pltpu.get_tpu_info().vmem_capacity_bytes)
    except Exception:
        phys = 64 * 1024 * 1024  # conservative: smallest per-core VMEM (v7x)
    # 25% headroom for compiler scratch; never ask for more than 96 MiB even
    # on the 128 MiB parts.  v7x (64 MiB) lands at 48 MiB, v5e/v6e at 96 MiB.
    return min(phys - phys // 4, 96 * 1024 * 1024)


def _block_cap_bytes(budget):
    # 2 operands x 2 pipeline buffers -> working set is 4x the per-operand
    # block.  Cap at 16 MiB (v5e/v6e); v7x's 48 MiB budget gives 12 MiB.
    return min(budget // 4, 16 * 1024 * 1024)


def _launch_copy(x2d, tr, *, budget, bytes_moved):
    rows, cols = x2d.shape
    return pl.pallas_call(
        _copy_kernel,
        out_shape=jax.ShapeDtypeStruct((rows, cols), x2d.dtype),
        grid=(pl.cdiv(rows, tr),),
        in_specs=[pl.BlockSpec((tr, cols), lambda i: (i, 0))],
        out_specs=pl.BlockSpec((tr, cols), lambda i: (i, 0)),
        compiler_params=pltpu.CompilerParams(
            dimension_semantics=("parallel",),
            vmem_limit_bytes=int(budget)),
        cost_estimate=pl.CostEstimate(
            flops=0, transcendentals=0, bytes_accessed=int(bytes_moved)),
    )(x2d)


def reshape_metadata(x, shape):
    """C-order (.view) reshape: metadata-only in XLA, zero HBM traffic."""
    return x.reshape(_resolve_shape(int(x.size), shape))


def reshape_pallas_copy(x, shape, *, max_block_bytes=None):
    """Reshape realized through an explicit, well-tiled Pallas identity copy."""
    total = int(x.size)
    target = _resolve_shape(total, shape)
    dtype = x.dtype
    if total == 0:
        return jnp.reshape(x, target)

    itemsize = jnp.dtype(dtype).itemsize
    sub = _sublane_multiple(dtype)
    budget = _vmem_budget_bytes()
    block_cap = _block_cap_bytes(budget)
    if max_block_bytes is not None:  # test hook / manual override
        block_cap = max(1, min(block_cap, int(max_block_bytes)))

    flat = x.reshape(-1)  # metadata-only

    # --- Path 1: lane-dense 2D tiling, no padding, no post-slice -----------
    cols = next((c for c in _COL_CANDIDATES if total % c == 0), None)
    if cols is not None:
        rows = total // cols
        tr_cap = max(sub, (block_cap // (cols * itemsize)) // sub * sub)
        tr = min(tr_cap, _round_up(rows, sub))
        if rows > sub * _MIN_PIPELINE_STEPS:
            # bound block so >= ~4 steps pipeline (overlap in/out DMAs)
            tr = min(tr, _round_up(pl.cdiv(rows, _MIN_PIPELINE_STEPS), sub))
        if tr >= rows:
            tr = rows  # single row-block: full-dim exception to the (8,) rule
        out2d = _launch_copy(flat.reshape(rows, cols), tr,
                             budget=budget,
                             bytes_moved=2 * total * itemsize)
        return out2d.reshape(target)

    # --- Path 2: small ragged totals -> one full-array block ---------------
    # Padded VMEM footprint of a (1, N) tile is ~32 B/element (one packed
    # 32-bit sublane column per lane), independent of dtype.
    if 32 * _round_up(total, 128) <= block_cap:
        out2d = _launch_copy(flat.reshape(1, total), 1,
                             budget=budget,
                             bytes_moved=2 * total * itemsize)
        return out2d.reshape(target)

    # --- Path 3 (rare): large totals with no multiple-of-128 divisor -------
    # Pad only to a full last row; the partial last row-block is still handled
    # by Pallas masking, so padding is at most (cols-1) elements.
    cols = 512
    rows = pl.cdiv(total, cols)
    padded_total = rows * cols
    tr_cap = max(sub, (block_cap // (cols * itemsize)) // sub * sub)
    tr = min(tr_cap, _round_up(rows, sub))
    if rows > sub * _MIN_PIPELINE_STEPS:
        tr = min(tr, _round_up(pl.cdiv(rows, _MIN_PIPELINE_STEPS), sub))
    if tr >= rows:
        tr = rows
    flat_p = jnp.pad(flat, (0, padded_total - total))
    out2d = _launch_copy(flat_p.reshape(rows, cols), tr,
                         budget=budget,
                         bytes_moved=2 * padded_total * itemsize)
    return out2d.reshape(-1)[:total].reshape(target)


class Reshape:
    """Pallas/JAX port of the PyTorch Reshape(nn.Module).

    A contiguous C-order `.view` is free metadata in XLA, so the default
    forward performs no HBM copy at all.  Pass use_pallas_copy=True to route
    the data through the explicit Pallas identity-copy kernel instead.
    """

    def __init__(self, *args, use_pallas_copy=False):
        self.shape = args
        self.use_pallas_copy = use_pallas_copy

    def __call__(self, x):
        if self.use_pallas_copy:
            return reshape_pallas_copy(x, self.shape)
        return reshape_metadata(x, self.shape)


if __name__ == "__main__":
    key = jax.random.PRNGKey(0)
    # small NCHW-like input consistent with typical laddervae usage
    x = jax.random.normal(key, (2, 4, 16, 16), dtype=jnp.float32)
    ref = x.reshape(2, -1)

    # 1) Default (recommended) path: metadata-only reshape, zero HBM traffic.
    y_fast = jax.block_until_ready(Reshape(2, -1)(x))
    assert y_fast.shape == (2, 1024)
    assert y_fast.dtype == x.dtype
    assert bool(jnp.array_equal(y_fast, ref))

    # 2) Explicit Pallas copy path (path 1: lane-dense, no padding).
    y_pallas = jax.block_until_ready(Reshape(2, -1, use_pallas_copy=True)(x))
    assert y_pallas.shape == (2, 1024)
    assert y_pallas.dtype == x.dtype
    assert bool(jnp.array_equal(y_pallas, ref))

    # 3) Odd-sized bf16 input: path 2 (single full-array block, no padding).
    x2 = jax.random.normal(jax.random.PRNGKey(1), (3, 5, 7), dtype=jnp.bfloat16)
    y2 = jax.block_until_ready(reshape_pallas_copy(x2, (5, -1)))
    assert y2.shape == (5, 21)
    assert bool(jnp.array_equal(y2, x2.reshape(5, 21)))

    # 4) Force small blocks to exercise grid > 1 with a masked partial last
    #    row-block (rows=25, tr=8 -> 4 grid steps, last step 1 valid row).
    x3 = jax.random.normal(jax.random.PRNGKey(2), (25, 128), dtype=jnp.float32)
    y3 = jax.block_until_ready(
        reshape_pallas_copy(x3, (5, -1), max_block_bytes=8 * 128 * 4))
    assert y3.shape == (5, 640)
    assert bool(jnp.array_equal(y3, x3.reshape(5, 640)))

    print("KERNEL_OK")
</pallas_src>

<mosaic_0001>
module attributes {stable_mosaic.version = 11 : i64} {
  func.func @_copy_kernel(%arg0: i32, %arg1: memref<1x2048xf32, #tpu.memory_space<vmem>>, %arg2: memref<1x2048xf32, #tpu.memory_space<vmem>>) attributes {dimension_semantics = [#tpu.dimension_semantics<parallel>], iteration_bounds = array<i64: 1>, scalar_prefetch = 0 : i64, scratch_operands = 0 : i64, tpu.core_type = #tpu.core_type<tc>, window_params = [{transform_indices = @transform_0, window_bounds = array<i64: 1, 2048>}, {transform_indices = @transform_1, window_bounds = array<i64: 1, 2048>}]} {
    %c0 = arith.constant 0 : index
    %c0_0 = arith.constant 0 : index
    %0 = vector.load %arg1[%c0, %c0_0] : memref<1x2048xf32, #tpu.memory_space<vmem>>, vector<1x2048xf32>
    %c0_1 = arith.constant 0 : index
    %c0_2 = arith.constant 0 : index
    %1 = vector.load %arg2[%c0_1, %c0_2] : memref<1x2048xf32, #tpu.memory_space<vmem>>, vector<1x2048xf32>
    tpu.vector_store %arg2[%c0_1, %c0_2], %0 {strides = array<i32>} : memref<1x2048xf32, #tpu.memory_space<vmem>>, vector<1x2048xf32>,
    return
  }
  func.func @transform_0(%arg0: i32) -> (i32, i32) {
    %c0_i32 = arith.constant 0 : i32
    %c0_i32_0 = arith.constant 0 : i32
    return %arg0, %c0_i32 : i32, i32
  }
  func.func @transform_1(%arg0: i32) -> (i32, i32) {
    %c0_i32 = arith.constant 0 : i32
    %c0_i32_0 = arith.constant 0 : i32
    return %arg0, %c0_i32 : i32, i32
  }
}

</mosaic_0001>

<llo_original>
// kernel: tpu_custom_call.1
$region0: #{tpu_custom_call.1}
  #allocation0 [shape = 'u32[]', space=smem, size = 0x4, offset = 0x4, fixed_abs, tag = 'smem constant byte address 0x4 - core index']
  #allocation1 [shape = 'u32[144,128]{1,0:T(1,128)}', space=vmem, size = 0x12000, scoped, tag = 'internal scratch']
  %s0 = inlined_call_operand.hbm [shape: f32[1,2048], index: 0, kind: input, shape index: {}]
  %s1 = inlined_call_operand.hbm [shape: f32[1,2048], index: 1, kind: output, shape index: {}]
  %s2 = sld [smem:[#allocation0]]
  $region18: #{tpu_custom_call.1} parent=0
    _
  %s4 = ssub.s32 1, %s2
  %s5 = scalar_select 0, %s4, %s2
  $region1: #{tpu_custom_call.1} parent=0
    #allocation2 [shape = 'u8[8192]{0}', space=vmem, size = 0x2000, scoped, tag = 'input window, operand 0, single buffered']
    #allocation3 [shape = 's32[1]{0}', space=sflag, size = 0x4, scoped, tag = 'scoped memory for tpu_custom_call.1']
    #allocation4 [shape = 's32[1]{0}', space=sflag, size = 0x4, scoped, tag = 'scoped memory for tpu_custom_call.1']
    #allocation5 [shape = 'u8[8192]{0}', space=vmem, size = 0x2000, scoped, tag = 'output window, operand 0, single buffered']
    %6 = vsyncpa [#allocation3], 0
    %7 = vsyncpa [#allocation4], 0
    // Predicated region
    $region2: #{tpu_custom_call.1} parent=1 // pred_check
      _
    $region3: #{tpu_custom_call.1} parent=1 // pred_check_branch
      %9 = sbr.rel (0) target = $region5
    $region4: #{tpu_custom_call.1} parent=1 // pred_region
      %s11 = ssub.s32 256, 256
      %12 = vsyncadd [#allocation3], %s11
      %s14 = sshll.u32 [#allocation2], 4
      %s15 = int_to_ptr.vmem [resolvable:$true] %s14
      %17 = dma.hbm_to_vmem [thread:$0]  %s0, 256, %s15, [#allocation3]
    $region5: #{tpu_custom_call.1} parent=1 // pred_fallthru
      _
    // Predicated region
    $region6: #{tpu_custom_call.1} parent=1 // pred_check
      _
    $region7: #{tpu_custom_call.1} parent=1 // pred_check_branch
      %19 = sbr.rel (0) target = $region9
    $region8: #{tpu_custom_call.1} parent=1 // pred_region
      %20 = dma.done [#allocation3], 256
    $region9: #{tpu_custom_call.1} parent=1 // pred_fallthru
      _
    %v21 = vld [vmem:[#allocation2] sm:$0xff]
    %v22 = vld [vmem:[#allocation2 + $0x8] sm:$0xff]
    %23 = vst [vmem:[#allocation5] sm:$0xff] %v21
    %24 = vst [vmem:[#allocation5 + $0x8] sm:$0xff] %v22
    // Predicated region
    $region10: #{tpu_custom_call.1} parent=1 // pred_check
      _
    $region11: #{tpu_custom_call.1} parent=1 // pred_check_branch
      %26 = sbr.rel (0) target = $region13
    $region12: #{tpu_custom_call.1} parent=1 // pred_region
      %s28 = ssub.s32 256, 256
      %29 = vsyncadd [#allocation4], %s28
      %s31 = sshll.u32 [#allocation5], 4
      %s32 = int_to_ptr.vmem [resolvable:$true] %s31
      %34 = dma.vmem_to_hbm [thread:$0]  %s32, 256, %s1, [#allocation4]
    $region13: #{tpu_custom_call.1} parent=1 // pred_fallthru
      _
    // Predicated region
    $region14: #{tpu_custom_call.1} parent=1 // pred_check
      _
    $region15: #{tpu_custom_call.1} parent=1 // pred_check_branch
      %36 = sbr.rel (0) target = $region17
    $region16: #{tpu_custom_call.1} parent=1 // pred_region
      %37 = dma.done [#allocation4], 256
    $region17: #{tpu_custom_call.1} parent=1 // pred_fallthru
      _
    %38 = vsyncpa [#allocation3], 1
    %39 = vsyncpa [#allocation4], 1

</llo_original>
